<compile_context>
chip_gen: v5e
topology: v5e:2x2
jax: 0.10.0
libtpu: 0.0.40
codegen_flags: <defaults>
</compile_context>

<pallas_src>
import jax
import jax.numpy as jnp
from jax.experimental import pallas as pl
from jax.experimental.pallas import tpu as pltpu


def _pool_gate_kernel(x_ref, w_ref, gate_ref, acc_ref, pad_ref):
    # x_ref:   (C, HW_T)  input block (batch dim squeezed)
    # w_ref:   SMEM (K+1,) f32 = [w0/HW, ..., w_{K-1}/HW, bias]
    # gate_ref:(C, 1) f32  sigmoid gate for this batch element
    # acc_ref: (C, 1) f32  running channel sums
    # pad_ref: (C + 2*pad, 1) f32 zero-padded scratch for the shifted adds
    hw_i = pl.program_id(1)

    @pl.when(hw_i == 0)
    def _():
        acc_ref[...] = jnp.zeros_like(acc_ref)

    # Global-average-pool contribution of this spatial tile (f32 accumulate).
    acc_ref[...] += jnp.sum(x_ref[...].astype(jnp.float32), axis=-1,
                            keepdims=True)

    @pl.when(hw_i == pl.num_programs(1) - 1)
    def _():
        c = acc_ref.shape[0]
        k = w_ref.shape[0] - 1          # number of conv taps
        pad = (k - 1) // 2
        # Zero-padded copy of the channel sums, then K shifted reads.
        # (VPU adds only; 1/HW is already folded into the taps.)
        pad_ref[...] = jnp.zeros_like(pad_ref)
        pad_ref[pl.ds(pad, c), :] = acc_ref[...]
        y = w_ref[0] * pad_ref[pl.ds(0, c), :]
        for t in range(1, k):
            y = y + w_ref[t] * pad_ref[pl.ds(t, c), :]
        gate_ref[...] = jax.nn.sigmoid(y + w_ref[k])


def _apply_kernel(x_ref, g_ref, o_ref):
    # x_ref: (C, HW_T); g_ref: (C, 1) f32; o_ref: (C, HW_T)
    o_ref[...] = (x_ref[...].astype(jnp.float32) * g_ref[...]).astype(o_ref.dtype)


def _round_up(a: int, b: int) -> int:
    return (a + b - 1) // b * b


def eca_attention(x, conv_w, conv_b, *, block_bytes=1 << 20):
    """ECA forward.  x: (B, C, H, W); conv_w: (1, 1, K); conv_b: (1,)."""
    B, C, H, W = x.shape
    HW = H * W
    K = conv_w.shape[-1]
    pad = (K - 1) // 2
    dt = x.dtype
    itemsize = jnp.dtype(dt).itemsize

    # K taps with the 1/(H*W) mean folded in, plus the bias -> SMEM table.
    taps = conv_w.reshape(K).astype(jnp.float32) * (1.0 / HW)
    wtab = jnp.concatenate([taps, conv_b.reshape(1).astype(jnp.float32)])

    # Lane-dense spatial tiling: multiple of 128 lanes, sized so each
    # (C, hw_tile) block stays around `block_bytes` (bounds VMEM per chip).
    max_lanes = max(128, (block_bytes // (C * itemsize)) // 128 * 128)
    hw_tile = min(_round_up(HW, 128), max_lanes)
    hw_pad = _round_up(HW, hw_tile)
    n_hw = hw_pad // hw_tile

    x_flat = x.reshape(B, C, HW)
    if hw_pad != HW:
        x_flat = jnp.pad(x_flat, ((0, 0), (0, 0), (0, hw_pad - HW)))

    # Pass 1: pooled means -> K-tap channel conv -> sigmoid gate (B, C, 1).
    gate = pl.pallas_call(
        _pool_gate_kernel,
        out_shape=jax.ShapeDtypeStruct((B, C, 1), jnp.float32),
        grid=(B, n_hw),
        in_specs=[
            pl.BlockSpec((pl.Squeezed(), C, hw_tile), lambda b, h: (b, 0, h)),
            pl.BlockSpec(memory_space=pltpu.MemorySpace.SMEM),
        ],
        out_specs=pl.BlockSpec((pl.Squeezed(), C, 1), lambda b, h: (b, 0, 0)),
        scratch_shapes=[
            pltpu.VMEM((C, 1), jnp.float32),
            pltpu.VMEM((C + 2 * pad, 1), jnp.float32),
        ],
        compiler_params=pltpu.CompilerParams(
            dimension_semantics=("parallel", "arbitrary")),
    )(x_flat, wtab)

    # Pass 2: elementwise gating, tiled over (B, HW); both grid axes parallel
    # (megacore-friendly at B=1).  Output aliases the padded input buffer.
    out_flat = pl.pallas_call(
        _apply_kernel,
        out_shape=jax.ShapeDtypeStruct((B, C, hw_pad), dt),
        grid=(B, n_hw),
        in_specs=[
            pl.BlockSpec((pl.Squeezed(), C, hw_tile), lambda b, h: (b, 0, h)),
            pl.BlockSpec((pl.Squeezed(), C, 1), lambda b, h: (b, 0, 0)),
        ],
        out_specs=pl.BlockSpec((pl.Squeezed(), C, hw_tile),
                               lambda b, h: (b, 0, h)),
        input_output_aliases={0: 0},
        compiler_params=pltpu.CompilerParams(
            dimension_semantics=("parallel", "parallel")),
    )(x_flat, gate)

    if hw_pad != HW:
        out_flat = out_flat[:, :, :HW]
    return out_flat.reshape(B, C, H, W)


def _reference(x, conv_w, conv_b):
    # Pure-JAX reference matching the PyTorch forward.
    B, C, H, W = x.shape
    K = conv_w.shape[-1]
    pad = (K - 1) // 2
    m = jnp.mean(x.astype(jnp.float32), axis=(2, 3))    # (B, C)
    m_pad = jnp.pad(m, ((0, 0), (pad, pad)))            # (B, C + 2*pad)
    w = conv_w.reshape(K).astype(jnp.float32)
    y = sum(w[k] * m_pad[:, k:k + C] for k in range(K)) + conv_b[0]
    a = jax.nn.sigmoid(y)                               # (B, C)
    return x * a[:, :, None, None].astype(x.dtype)


if __name__ == "__main__":
    key = jax.random.PRNGKey(0)
    kx, kw, kb = jax.random.split(key, 3)

    B, C, H, W = 2, 4, 16, 16
    x = jax.random.normal(kx, (B, C, H, W), dtype=jnp.float32)

    # Deterministic synthetic params for Conv1d(1, 1, kernel_size=3, padding=1)
    conv_w = jax.random.normal(kw, (1, 1, 3), dtype=jnp.float32) * 0.5
    conv_b = jax.random.normal(kb, (1,), dtype=jnp.float32) * 0.1

    out = eca_attention(x, conv_w, conv_b)
    out = jax.block_until_ready(out)

    ref = _reference(x, conv_w, conv_b)
    assert out.shape == (B, C, H, W)
    assert jnp.max(jnp.abs(out - ref)) < 1e-5

    print("KERNEL_OK")
</pallas_src>

<mosaic_0001>
module attributes {stable_mosaic.version = 11 : i64} {
  func.func @_pool_gate_kernel(%arg0: i32, %arg1: i32, %arg2: memref<1x4x256xf32, #tpu.memory_space<vmem>>, %arg3: memref<4xf32, #tpu.memory_space<smem>>, %arg4: memref<1x4x1xf32, #tpu.memory_space<vmem>>, %arg5: memref<4x1xf32, #tpu.memory_space<vmem>>, %arg6: memref<6x1xf32, #tpu.memory_space<vmem>>) attributes {dimension_semantics = [#tpu.dimension_semantics<parallel>, #tpu.dimension_semantics<arbitrary>], iteration_bounds = array<i64: 2, 1>, scalar_prefetch = 0 : i64, scratch_operands = 2 : i64, tpu.core_type = #tpu.core_type<tc>, window_params = [{transform_indices = @transform_0, window_bounds = array<i64: 1, 4, 256>}, {transform_indices = @transform_1, window_bounds = array<i64: 4>}, {transform_indices = @transform_2, window_bounds = array<i64: 1, 4, 1>}]} {
    %c0_i32 = arith.constant 0 : i32
    %0 = arith.cmpi eq, %arg1, %c0_i32 : i32
    %1 = arith.extui %0 : i1 to i32
    %c0_i32_0 = arith.constant 0 : i32
    %2 = arith.cmpi ne, %1, %c0_i32_0 : i32
    scf.if %2 {
      %cst_9 = arith.constant 0.000000e+00 : f32
      %13 = vector.broadcast %cst_9 : f32 to vector<4x1xf32>
      %c0_10 = arith.constant 0 : index
      %c0_11 = arith.constant 0 : index
      %14 = vector.load %arg5[%c0_10, %c0_11] : memref<4x1xf32, #tpu.memory_space<vmem>>, vector<4x1xf32>
      tpu.vector_store %arg5[%c0_10, %c0_11], %13 {strides = array<i32>} : memref<4x1xf32, #tpu.memory_space<vmem>>, vector<4x1xf32>,
    } else {
    }
    %c0 = arith.constant 0 : index
    %c0_1 = arith.constant 0 : index
    %3 = vector.load %arg5[%c0, %c0_1] : memref<4x1xf32, #tpu.memory_space<vmem>>, vector<4x1xf32>
    %c0_2 = arith.constant 0 : index
    %c0_3 = arith.constant 0 : index
    %c0_4 = arith.constant 0 : index
    %4 = vector.load %arg2[%c0_2, %c0_3, %c0_4] : memref<1x4x256xf32, #tpu.memory_space<vmem>>, vector<1x4x256xf32>
    %5 = vector.shape_cast %4 : vector<1x4x256xf32> to vector<4x256xf32>
    %cst = arith.constant dense<0.000000e+00> : vector<4xf32>
    %6 = vector.multi_reduction <add>, %5, %cst [1] : vector<4x256xf32> to vector<4xf32>
    %7 = vector.shape_cast %6 : vector<4xf32> to vector<4x1xf32>
    %8 = arith.addf %3, %7 : vector<4x1xf32>
    %c0_5 = arith.constant 0 : index
    %c0_6 = arith.constant 0 : index
    %9 = vector.load %arg5[%c0_5, %c0_6] : memref<4x1xf32, #tpu.memory_space<vmem>>, vector<4x1xf32>
    tpu.vector_store %arg5[%c0_5, %c0_6], %8 {strides = array<i32>} : memref<4x1xf32, #tpu.memory_space<vmem>>, vector<4x1xf32>,
    %c0_i32_7 = arith.constant 0 : i32
    %10 = arith.cmpi eq, %arg1, %c0_i32_7 : i32
    %11 = arith.extui %10 : i1 to i32
    %c0_i32_8 = arith.constant 0 : i32
    %12 = arith.cmpi ne, %11, %c0_i32_8 : i32
    scf.if %12 {
      %cst_9 = arith.constant 0.000000e+00 : f32
      %13 = vector.broadcast %cst_9 : f32 to vector<6x1xf32>
      %c0_10 = arith.constant 0 : index
      %c0_11 = arith.constant 0 : index
      %14 = vector.load %arg6[%c0_10, %c0_11] : memref<6x1xf32, #tpu.memory_space<vmem>>, vector<6x1xf32>
      tpu.vector_store %arg6[%c0_10, %c0_11], %13 {strides = array<i32>} : memref<6x1xf32, #tpu.memory_space<vmem>>, vector<6x1xf32>,
      %c0_12 = arith.constant 0 : index
      %c0_13 = arith.constant 0 : index
      %15 = vector.load %arg5[%c0_12, %c0_13] : memref<4x1xf32, #tpu.memory_space<vmem>>, vector<4x1xf32>
      %c1 = arith.constant 1 : index
      %c0_14 = arith.constant 0 : index
      %16 = vector.load %arg6[%c1, %c0_14] : memref<6x1xf32, #tpu.memory_space<vmem>>, vector<4x1xf32>
      tpu.vector_store %arg6[%c1, %c0_14], %15 {strides = array<i32>} : memref<6x1xf32, #tpu.memory_space<vmem>>, vector<4x1xf32>,
      %c0_15 = arith.constant 0 : index
      %17 = memref.load %arg3[%c0_15] : memref<4xf32, #tpu.memory_space<smem>>
      %c0_16 = arith.constant 0 : index
      %c0_17 = arith.constant 0 : index
      %18 = vector.load %arg6[%c0_16, %c0_17] : memref<6x1xf32, #tpu.memory_space<vmem>>, vector<4x1xf32>
      %19 = vector.broadcast %17 : f32 to vector<4x1xf32>
      %20 = arith.mulf %19, %18 : vector<4x1xf32>
      %c1_18 = arith.constant 1 : index
      %21 = memref.load %arg3[%c1_18] : memref<4xf32, #tpu.memory_space<smem>>
      %c1_19 = arith.constant 1 : index
      %c0_20 = arith.constant 0 : index
      %22 = vector.load %arg6[%c1_19, %c0_20] : memref<6x1xf32, #tpu.memory_space<vmem>>, vector<4x1xf32>
      %23 = vector.broadcast %21 : f32 to vector<4x1xf32>
      %24 = arith.mulf %23, %22 : vector<4x1xf32>
      %25 = arith.addf %20, %24 : vector<4x1xf32>
      %c2 = arith.constant 2 : index
      %26 = memref.load %arg3[%c2] : memref<4xf32, #tpu.memory_space<smem>>
      %c2_21 = arith.constant 2 : index
      %c0_22 = arith.constant 0 : index
      %27 = vector.load %arg6[%c2_21, %c0_22] : memref<6x1xf32, #tpu.memory_space<vmem>>, vector<4x1xf32>
      %28 = vector.broadcast %26 : f32 to vector<4x1xf32>
      %29 = arith.mulf %28, %27 : vector<4x1xf32>
      %30 = arith.addf %25, %29 : vector<4x1xf32>
      %c3 = arith.constant 3 : index
      %31 = memref.load %arg3[%c3] : memref<4xf32, #tpu.memory_space<smem>>
      %32 = vector.broadcast %31 : f32 to vector<4x1xf32>
      %33 = arith.addf %30, %32 : vector<4x1xf32>
      %34 = arith.negf %33 : vector<4x1xf32>
      %35 = math.exp %34 : vector<4x1xf32>
      %cst_23 = arith.constant 1.000000e+00 : f32
      %36 = vector.broadcast %cst_23 : f32 to vector<4x1xf32>
      %37 = arith.addf %36, %35 : vector<4x1xf32>
      %38 = arith.divf %36, %37 : vector<4x1xf32>
      %c0_24 = arith.constant 0 : index
      %c0_25 = arith.constant 0 : index
      %c0_26 = arith.constant 0 : index
      %39 = vector.load %arg4[%c0_24, %c0_25, %c0_26] : memref<1x4x1xf32, #tpu.memory_space<vmem>>, vector<1x4x1xf32>
      %40 = vector.shape_cast %39 : vector<1x4x1xf32> to vector<4x1xf32>
      %41 = vector.shape_cast %38 : vector<4x1xf32> to vector<1x4x1xf32>
      tpu.vector_store %arg4[%c0_24, %c0_25, %c0_26], %41 {strides = array<i32>} : memref<1x4x1xf32, #tpu.memory_space<vmem>>, vector<1x4x1xf32>,
    } else {
    }
    return
  }
  func.func @transform_0(%arg0: i32, %arg1: i32) -> (i32, i32, i32) {
    %c0_i32 = arith.constant 0 : i32
    %c0_i32_0 = arith.constant 0 : i32
    return %arg0, %c0_i32, %arg1 : i32, i32, i32
  }
  func.func @transform_1(%arg0: i32, %arg1: i32) -> i32 {
    %c0_i32 = arith.constant 0 : i32
    %c0_i32_0 = arith.constant 0 : i32
    return %c0_i32 : i32
  }
  func.func @transform_2(%arg0: i32, %arg1: i32) -> (i32, i32, i32) {
    %c0_i32 = arith.constant 0 : i32
    %c0_i32_0 = arith.constant 0 : i32
    %c0_i32_1 = arith.constant 0 : i32
    return %arg0, %c0_i32, %c0_i32_0 : i32, i32, i32
  }
}

</mosaic_0001>

<llo_original>
// kernel: tpu_custom_call.1
$region0: #{tpu_custom_call.1}
  #allocation0 [shape = 'u32[]', space=smem, size = 0x4, offset = 0x4, fixed_abs, tag = 'smem constant byte address 0x4 - core index']
  #allocation1 [shape = 'u32[72,128]{1,0:T(1,128)}', space=vmem, size = 0x9000, scoped, tag = 'internal scratch']
  #allocation2 [shape = 'f32[4,1]{1,0:T(4,128)}', space=vmem, size = 0x800, scoped, tag = 'scratch operand']
  #allocation3 [shape = 'f32[6,1]{1,0:T(8,128)}', space=vmem, size = 0x1000, scoped, tag = 'scratch operand']
  %s0 = inlined_call_operand.hbm [shape: f32[2,4,256], index: 0, kind: input, shape index: {}]
  %s1 = inlined_call_operand.hbm [shape: f32[4], index: 1, kind: input, shape index: {}]
  %s2 = inlined_call_operand.vmem [shape: f32[2,4,1], index: 2, kind: output, shape index: {}]
  %s3 = sld [smem:[#allocation0]]
  $region57: #{tpu_custom_call.1} parent=0
    _
  %s5 = ssub.s32 1, %s3
  %s6 = scalar_select 0, %s5, %s3
  $region1: #{tpu_custom_call.1} parent=0
    #allocation4 [shape = 'u8[8192]{0}', space=vmem, size = 0x2000, scoped, tag = 'input window, operand 0']
    #allocation5 [shape = 's32[2]{0}', space=sflag, size = 0x8, scoped, tag = 'scoped memory for tpu_custom_call.1']
    #allocation6 [shape = 's32[2]{0}', space=sflag, size = 0x8, scoped, tag = 'scoped memory for tpu_custom_call.1']
    #allocation7 [shape = 'u8[512]{0}', space=smem, size = 0x200, scoped, tag = 'input window, operand 1, single buffered']
    %7 = vsyncpa [#allocation5], 0
    %s8 = scalar_lea.sflag [#allocation5], 1
    %9 = vsyncpa %s8, 0
    %10 = vsyncpa [#allocation6], 0
    loop: start=0, step=1, limit=4
    $region2: #{tpu_custom_call.1} parent=1 // loop_pre_header
      _
    $region3: #{tpu_custom_call.1} parent=1 // loop_header
      %s12 = sphi 0, %s16
      %p13 = scmp.ge.s32.totalorder %s12, 4
      %s19 = sphi 0, %s31
      %s20 = sphi 0, %s27
      %s21 = sphi 0, %s19
      %s22 = sphi 0, %s20
      %s23 = sphi 0, %s21
      %s24 = sphi 0, %s22
      %s36 = sphi 0, %s38
      %s39 = sphi 0, %s36
      %s40 = sphi 0, %s39
      %s56 = sphi 0, %s40
      %s60 = sphi 0, %s60
      %s62 = sphi 0, %s60
      %s63 = sphi 0, %s62
      %s77 = sphi 0, %s63
      %s83 = sphi 0, %s85
      %s86 = sphi 0, %s83
      %s87 = sphi 0, %s86
      %s103 = sphi 0, %s87
    $region4: #{tpu_custom_call.1} parent=1 // loop_header_branch
      %15 = sbr.rel (%p13) target = $region8
    $region5: #{tpu_custom_call.1} parent=1 // loop_body
      %s17 = ssub.s32 %s12, 1
      %s18 = ssub.s32 %s12, 2
      %s25 = sadd.s32 1, %s20
      %p26 = scmp.ge.s32.totalorder %s25, 1
      %s27 = scalar_select %p26, 0, %s25
      %s28 = sadd.s32 1, %s19
      %s29 = scalar_select %p26, %s28, %s19
      %p30 = scmp.ge.s32.totalorder %s29, 2
      %s31 = scalar_select %p30, 0, %s29
      %s32 = ssub.s32 %s19, %s31
      %s33 = ssub.s32 %s20, %s27
      %s34 = sor.u32 %s32, %s33
      %p35 = scmp.eq.s32.totalorder %s34, 0
      %s37 = sadd.s32 %s36, 1
      %s38 = scalar_select %p35, %s36, %s37
      %p41 = pneg %p35
      %p42 = scmp.eq.s32.totalorder %s12, 1
      %p43 = por %p41, %p42
      %p44 = scmp.ne.s32.totalorder %s36, %s39
      %p45 = scmp.eq.s32.totalorder %s12, 0
      %p46 = por %p44, %p45
      %p47 = scmp.ne.s32.totalorder %s36, %s39
      %p48 = scmp.eq.s32.totalorder %s17, 1
      %p49 = por %p47, %p48
      %p50 = scmp.ne.s32.totalorder %s39, %s40
      %p51 = scmp.eq.s32.totalorder %s17, 0
      %p52 = por %p50, %p51
      %p53 = scmp.ne.s32.totalorder %s39, %s40
      %p54 = scmp.eq.s32.totalorder %s18, 1
      %p55 = por %p53, %p54
      %p57 = scmp.ne.s32.totalorder %s40, %s56
      %p58 = scmp.eq.s32.totalorder %s18, 0
      %p59 = por %p57, %p58
      %s61 = sadd.s32 %s60, 1
      %p64 = scmp.eq.s32.totalorder %s12, 1
      %p65 = scmp.ne.s32.totalorder %s60, %s62
      %p66 = scmp.eq.s32.totalorder %s12, 0
      %p67 = por %p65, %p66
      %p68 = scmp.ne.s32.totalorder %s60, %s62
      %p69 = scmp.eq.s32.totalorder %s17, 1
      %p70 = por %p68, %p69
      %p71 = scmp.ne.s32.totalorder %s62, %s63
      %p72 = scmp.eq.s32.totalorder %s17, 0
      %p73 = por %p71, %p72
      %p74 = scmp.ne.s32.totalorder %s62, %s63
      %p75 = scmp.eq.s32.totalorder %s18, 1
      %p76 = por %p74, %p75
      %p78 = scmp.ne.s32.totalorder %s63, %s77
      %p79 = scmp.eq.s32.totalorder %s18, 0
      %p80 = por %p78, %p79
      %s81 = ssub.s32 %s19, %s31
      %p82 = scmp.eq.s32.totalorder %s81, 0
      %s84 = sadd.s32 %s83, 1
      %s85 = scalar_select %p82, %s83, %s84
      %p88 = pneg %p82
      %p89 = scmp.eq.s32.totalorder %s12, 1
      %p90 = por %p88, %p89
      %p91 = scmp.ne.s32.totalorder %s83, %s86
      %p92 = scmp.eq.s32.totalorder %s12, 0
      %p93 = por %p91, %p92
      %p94 = scmp.ne.s32.totalorder %s83, %s86
      %p95 = scmp.eq.s32.totalorder %s17, 1
      %p96 = por %p94, %p95
      %p97 = scmp.ne.s32.totalorder %s86, %s87
      %p98 = scmp.eq.s32.totalorder %s17, 0
      %p99 = por %p97, %p98
      %p100 = scmp.ne.s32.totalorder %s86, %s87
      %p101 = scmp.eq.s32.totalorder %s18, 1
      %p102 = por %p100, %p101
      %p104 = scmp.ne.s32.totalorder %s87, %s103
      %p105 = scmp.eq.s32.totalorder %s18, 0
      %p106 = por %p104, %p105
      %p107 = scmp.le.s32.totalorder 1, %s12
      %p108 = scmp.lt.s32.totalorder %s12, 3
      %p109 = pnand %p107, %p108
      %p110 = pneg %p109
      // Predicated region
      $region9: #{tpu_custom_call.1} parent=5 // pred_check
        _
      $region10: #{tpu_custom_call.1} parent=5 // pred_check_branch
        %112 = sbr.rel (%p109) target = $region12
      $region11: #{tpu_custom_call.1} parent=5 // pred_region
        %s113 = ssub.s32 %s12, 1
        // Predicated region
        $region13: #{tpu_custom_call.1} parent=11 // pred_check
          %p114 = pneg %p73
        $region14: #{tpu_custom_call.1} parent=11 // pred_check_branch
          %116 = sbr.rel (%p114) target = $region16
        $region15: #{tpu_custom_call.1} parent=11 // pred_region
          %118 = vsyncadd [#allocation6], 0
          %s120 = sshll.u32 %s1, 4
          %s121 = int_to_ptr.hbm [resolvable:$true] %s120
          %123 = dma.hbm_to_smem %s121, 16, [#allocation7], [#allocation6]
        $region16: #{tpu_custom_call.1} parent=11 // pred_fallthru
          _
      $region12: #{tpu_custom_call.1} parent=5 // pred_fallthru
        _
      %p124 = scmp.lt.s32.totalorder %s12, 2
      // Predicated region
      $region17: #{tpu_custom_call.1} parent=5 // pred_check
        %p125 = pneg %p124
      $region18: #{tpu_custom_call.1} parent=5 // pred_check_branch
        %127 = sbr.rel (%p125) target = $region20
      $region19: #{tpu_custom_call.1} parent=5 // pred_region
        // Predicated region
        $region21: #{tpu_custom_call.1} parent=19 // pred_check
          %p128 = pneg %p46
        $region22: #{tpu_custom_call.1} parent=19 // pred_check_branch
          %130 = sbr.rel (%p128) target = $region24
        $region23: #{tpu_custom_call.1} parent=19 // pred_region
          %s131 = sand.u32 %s36, 1
          %s132 = scalar_lea.sflag [#allocation5], %s131
          %s133 = sand.u32 %s36, 1
          %s134 = smul.addr %s133, 8
          %s135 = scalar_lea.vmem [#allocation4], %s134
          %s136 = smul.u32 2, %s20
          %138 = vsyncadd %s132, 0
          %s139 = smul.addr %s19, 2
          %s140 = sadd.s32 %s136, %s139
          %s141 = smul.addr %s140, 4
          %s142 = scalar_lea.hbm %s0, %s141
          %s144 = sshll.u32 %s142, 4
          %s145 = int_to_ptr.hbm [resolvable:$true] %s144
          %s146 = sshll.u32 %s135, 4
          %s147 = int_to_ptr.vmem [resolvable:$true] %s146
          %149 = dma.hbm_to_vmem [thread:$0]  %s145, 128, %s147, %s132
        $region24: #{tpu_custom_call.1} parent=19 // pred_fallthru
          _
      $region20: #{tpu_custom_call.1} parent=5 // pred_fallthru
        _
      %p150 = scmp.le.s32.totalorder 1, %s12
      %p151 = scmp.lt.s32.totalorder %s12, 3
      %p152 = pnand %p150, %p151
      %p153 = pneg %p152
      // Predicated region
      $region25: #{tpu_custom_call.1} parent=5 // pred_check
        _
      $region26: #{tpu_custom_call.1} parent=5 // pred_check_branch
        %155 = sbr.rel (%p152) target = $region28
      $region27: #{tpu_custom_call.1} parent=5 // pred_region
        %s156 = ssub.s32 %s12, 1
        %s157 = sand.u32 %s39, 1
        %s158 = scalar_lea.sflag [#allocation5], %s157
        %s159 = sand.u32 %s39, 1
        %s160 = smul.addr %s159, 8
        %s161 = scalar_lea.vmem [#allocation4], %s160
        // Predicated region
        $region29: #{tpu_custom_call.1} parent=27 // pred_check
          %p162 = pneg %p52
        $region30: #{tpu_custom_call.1} parent=27 // pred_check_branch
          %164 = sbr.rel (%p162) target = $region32
        $region31: #{tpu_custom_call.1} parent=27 // pred_region
          %166 = dma.done %s158, 128
        $region32: #{tpu_custom_call.1} parent=27 // pred_fallthru
          _
        // Predicated region
        $region33: #{tpu_custom_call.1} parent=27 // pred_check
          %p167 = pneg %p73
        $region34: #{tpu_custom_call.1} parent=27 // pred_check_branch
          %169 = sbr.rel (%p167) target = $region36
        $region35: #{tpu_custom_call.1} parent=27 // pred_region
          %171 = dma.done [#allocation6], 16
        $region36: #{tpu_custom_call.1} parent=27 // pred_fallthru
          _
        %172 = sfence
        %s173 = sand.u32 %s39, 1
        %s174 = scalar_lea.sflag [#allocation5], %s173
        %s175 = sand.u32 %s39, 1
        %s176 = smul.addr %s175, 8
        %s177 = scalar_lea.vmem [#allocation4], %s176
        %p178 = pneg %p52
        %p179 = pneg %p49
        %p180 = pneg %p73
        %p181 = pneg %p70
        %p182 = pneg %p99
        %p183 = pneg %p96
        %p184 = scmp.lt.s32.totalorder %s21, 1
        %s185 = scalar_select %p184, %s21, 1
        %s186 = smul.addr %s185, 4
        %s187 = scalar_lea.vmem %s2, %s186
        %s188 = smul.u32 2, %s22
        %p189 = scmp.lt.s32.totalorder %s21, 1
        %s190 = scalar_select %p189, %s21, 1
        %s191 = smul.addr %s190, 4
        %s192 = scalar_lea.vmem %s2, %s191
        %p193 = scmp.eq.s32.totalorder %s22, 0
        // Predicated region
        $region37: #{tpu_custom_call.1} parent=27 // pred_check
          %p194 = pneg %p193
        $region38: #{tpu_custom_call.1} parent=27 // pred_check_branch
          %196 = sbr.rel (%p194) target = $region40
        $region39: #{tpu_custom_call.1} parent=27 // pred_region
          %vm197 = vcmask 3072
          %198 = vst.msk [vmem:[#allocation2] sm:$0xf] %vm197, 0.0
        $region40: #{tpu_custom_call.1} parent=27 // pred_fallthru
          _
        %v199 = vld [vmem:[#allocation2] sm:$0xf]
        %v200 = vld [vmem:[%s161] sm:$0xff]
        %202 = vst [vmem:[#allocation1] ss:$2 sm:$0xff] %v200
        %v203 = vld.sshfl [vmem:[#allocation1] sm:$0xff pattern:$0x75316420]
        %v204 = vld.sshfl [vmem:[#allocation1 + $0x8] sm:$0xff pattern:$0x75316420]
        %vm207 = vcmask 1043456
        %v208 = vsel %vm207, %v203, 0.0
        %v209 = vsel %vm207, %v204, 0.0
        %v210 = vadd.f32 %v208, %v209
        %211 = vadd.xlane.f32.xlu0 %v210
        %v212 = vpop.xlane.xlu0 %211
        %v213 = vadd.f32 %v199, %v212
        %vm214 = vcmask 3072
        %215 = vst.msk [vmem:[#allocation2] sm:$0xf] %vm214, %v213
        // Predicated region
        $region41: #{tpu_custom_call.1} parent=27 // pred_check
          %p216 = pneg %p193
        $region42: #{tpu_custom_call.1} parent=27 // pred_check_branch
          %218 = sbr.rel (%p216) target = $region44
        $region43: #{tpu_custom_call.1} parent=27 // pred_region
          %vm219 = vcmask 5120
          %220 = vst.msk [vmem:[#allocation3] sm:$0x3f] %vm219, 0.0
          %v221 = vld [vmem:[#allocation2] sm:$0xf]
          %222 = vst.msk [vmem:[#allocation3 + $0x1] sm:$0xf] %vm214, %v221
          %s223 = sld [smem:[#allocation7]]
          %v224 = vld [vmem:[#allocation3] sm:$0xf]
          %v225 = vstv %s223
          %v226 = vmul.f32 %v225, %v224
          %s227 = sld [smem:[#allocation7 + $0x1]]
          %v228 = vld [vmem:[#allocation3 + $0x1] sm:$0xf]
          %v229 = vstv %s227
          %v230 = vmul.f32 %v229, %v228
          %v231 = vadd.f32 %v226, %v230
          %s232 = sld [smem:[#allocation7 + $0x2]]
          %v233 = vld [vmem:[#allocation3 + $0x2] sm:$0xf]
          %v234 = vstv %s232
          %v235 = vmul.f32 %v234, %v233
          %v236 = vadd.f32 %v231, %v235
          %s237 = sld [smem:[#allocation7 + $0x3]]
          %v238 = vstv %s237
          %v239 = vadd.f32 %v236, %v238
          %v240 = vxor.u32 %v239, 2147483648
          %v241 = vmul.f32 %v240, 1.442695
          %v242 = vpow.pop %v241
          %v243 = vadd.f32 %v242, 1.0
          %v244 = vrcp.pop %v243
          %v245 = vmul.f32 %v243, %v244
          %v246 = vsub.f32 1.0, %v245
          %v247 = vmul.f32 %v244, %v246
          %v248 = vadd.f32 %v244, %v247
          %vm249 = vweird.f32 %v243
          %vm250 = vweird.f32 %v244
          %vm251 = vmor %vm249, %vm250
          %v252 = vsel %vm251, %v244, %v248
          %v253 = vand.u32 2147483647, %v243
          %vm254 = vcmp.eq.f32.partialorder %v253, 8.507059e+37
          %v255 = vand.u32 %v243, 2147483648
          %v256 = vor.u32 1.1754944e-38, %v255
          %v257 = vsel %vm254, %v256, %v252
          %v258 = vmul.f32 1.0, %v257
          %259 = vst.msk [vmem:[%s192] sm:$0xf] %vm214, %v258
        $region44: #{tpu_custom_call.1} parent=27 // pred_fallthru
          _
        %p260 = scmp.lt.s32.totalorder %s21, 1
        %s261 = scalar_select %p260, %s21, 1
        %s262 = smul.addr %s261, 4
        %s263 = scalar_lea.vmem %s2, %s262
        // Predicated region
        $region45: #{tpu_custom_call.1} parent=27 // pred_check
          %p264 = pneg %p96
        $region46: #{tpu_custom_call.1} parent=27 // pred_check_branch
          %266 = sbr.rel (%p264) target = $region48
        $region47: #{tpu_custom_call.1} parent=27 // pred_region
          _
        $region48: #{tpu_custom_call.1} parent=27 // pred_fallthru
          _
      $region28: #{tpu_custom_call.1} parent=5 // pred_fallthru
        _
      %p267 = scmp.le.s32.totalorder 2, %s12
      // Predicated region
      $region49: #{tpu_custom_call.1} parent=5 // pred_check
        %p268 = pneg %p267
      $region50: #{tpu_custom_call.1} parent=5 // pred_check_branch
        %270 = sbr.rel (%p268) target = $region52
      $region51: #{tpu_custom_call.1} parent=5 // pred_region
        %s271 = ssub.s32 %s12, 2
        // Predicated region
        $region53: #{tpu_custom_call.1} parent=51 // pred_check
          %p272 = pneg %p102
        $region54: #{tpu_custom_call.1} parent=51 // pred_check_branch
          %274 = sbr.rel (%p272) target = $region56
        $region55: #{tpu_custom_call.1} parent=51 // pred_region
          %p275 = scmp.lt.s32.totalorder %s23, 1
          %s276 = scalar_select %p275, %s23, 1
          %s277 = smul.addr %s276, 4
          %s278 = scalar_lea.vmem %s2, %s277
        $region56: #{tpu_custom_call.1} parent=51 // pred_fallthru
          _
      $region52: #{tpu_custom_call.1} parent=5 // pred_fallthru
        _
    $region6: #{tpu_custom_call.1} parent=1 // loop_footer
      %s16 = sadd.s32 1, %s12
    $region7: #{tpu_custom_call.1} parent=1 // loop_footer_branch
      %11 = sbr.rel target = $region3
    $region8: #{tpu_custom_call.1} parent=1 // loop_exit
      _
    %279 = vsyncpa [#allocation5], 1
    %s280 = scalar_lea.sflag [#allocation5], 1
    %281 = vsyncpa %s280, 1
    %282 = vsyncpa [#allocation6], 1
    %s283 = scalar_lea.sflag [#allocation6], 1
    %284 = vsyncpa %s283, 1

</llo_original>
